<compile_context>
chip_gen: v7x
topology: tpu7x:2x2x1
jax: 0.10.0
libtpu: 0.0.40
codegen_flags: <defaults>
</compile_context>

<pallas_src>
import functools

import numpy as np

import jax
import jax.numpy as jnp
from jax.experimental import pallas as pl
from jax.experimental.pallas import tpu as pltpu

LEAKY_SLOPE = 0.01


# ------------------------------------------------------------------ fused kernel

def _task_block_kernel(x_ref, pool_ref, gap_ref,
                       w1a_ref, b1a_ref, w2a_ref, b2a_ref,
                       w1b_ref, b1b_ref, w2b_ref, b2b_ref,
                       wfc_ref, bfc_ref, out_ref, *, matmul_dtype):
    """Entire Task_Block forward on a channels-last flat activation.

    x_ref   : (M, C)  with M = N*H*W
    pool_ref: (Mp, M) constant AvgPool2d(2, stride=1) operator, Mp = N*(H-1)*(W-1)
    gap_ref : (N, Mp) constant global-average-pool operator
    w*/b*   : BN-folded 1x1-conv weights (C, C)/(1, C);  wfc/bfc: (C, O)/(1, O)
    out_ref : (N, O)
    """

    def mm(a, w):
        # MXU matmul; operands optionally cast to bf16 (v6e/v7x), f32 accumulation.
        return jnp.dot(a.astype(matmul_dtype), w.astype(matmul_dtype),
                       preferred_element_type=jnp.float32)

    def leaky(v):
        return jnp.where(v > 0, v, LEAKY_SLOPE * v)

    def resblock(v, w1, b1, w2, b2):
        # conv1 -> bn1 -> LeakyReLU -> conv2 -> bn2 -> (+ identity skip) -> LeakyReLU
        h = leaky(mm(v, w1) + b1)
        h = mm(h, w2) + b2 + v
        return leaky(h)

    x = x_ref[...]                                                          # (M, C)
    h1 = resblock(x, w1a_ref[...], b1a_ref[...], w2a_ref[...], b2a_ref[...])
    hp = mm(pool_ref[...], h1)                                              # (Mp, C) avg-pool
    h2 = resblock(hp, w1b_ref[...], b1b_ref[...], w2b_ref[...], b2b_ref[...])
    g = mm(gap_ref[...], h2)                                                # (N, C) global mean
    out_ref[...] = mm(g, wfc_ref[...]) + bfc_ref[...]                       # (N, O) FC


# ------------------------------------------------------------------ constant pooling operators

def _avgpool_matrix(N, H, W):
    """Dense (N*(H-1)*(W-1), N*H*W) operator equal to AvgPool2d(kernel_size=2, stride=1)
    acting on a channels-last activation flattened to (N*H*W, C)."""
    Hp, Wp = H - 1, W - 1
    P = np.zeros((N * Hp * Wp, N * H * W), dtype=np.float32)
    for n in range(N):
        for i in range(Hp):
            for j in range(Wp):
                r = (n * Hp + i) * Wp + j
                for di in (0, 1):
                    for dj in (0, 1):
                        P[r, (n * H + i + di) * W + (j + dj)] = 0.25
    return jnp.asarray(P)


def _gap_matrix(N, S):
    """Dense (N, N*S) operator equal to AdaptiveAvgPool2d(1) on (N*S, C) rows."""
    G = np.zeros((N, N * S), dtype=np.float32)
    for n in range(N):
        G[n, n * S:(n + 1) * S] = 1.0 / S
    return jnp.asarray(G)


# ------------------------------------------------------------------ wrapper

def task_block_forward(x_nchw, params, *, use_bf16_matmul=False):
    """x_nchw: (N, C, H, W) float32 (PyTorch layout).  Returns (N, out_channels)."""
    N, C, H, W = x_nchw.shape
    Hp, Wp = H - 1, W - 1
    O = params["fc"][0].shape[1]

    # Layout plumbing in the wrapper (single cheap XLA op): NCHW -> channels-last (M, C).
    x_flat = jnp.transpose(x_nchw, (0, 2, 3, 1)).reshape(N * H * W, C).astype(jnp.float32)

    pool_mat = _avgpool_matrix(N, H, W)        # (Mp, M)
    gap_mat = _gap_matrix(N, Hp * Wp)          # (N, Mp)

    w1a, b1a = params["rb1"]["w1b1"]
    w2a, b2a = params["rb1"]["w2b2"]
    w1b, b1b = params["rb2"]["w1b1"]
    w2b, b2b = params["rb2"]["w2b2"]
    wfc, bfc = params["fc"]

    matmul_dtype = jnp.bfloat16 if use_bf16_matmul else jnp.float32
    kern = functools.partial(_task_block_kernel, matmul_dtype=matmul_dtype)

    n_in = 13
    return pl.pallas_call(
        kern,
        out_shape=jax.ShapeDtypeStruct((N, O), jnp.float32),
        # Whole-array VMEM blocks, no grid: everything fits comfortably on all TPU gens.
        in_specs=[pl.BlockSpec(memory_space=pltpu.MemorySpace.VMEM)] * n_in,
        out_specs=pl.BlockSpec(memory_space=pltpu.MemorySpace.VMEM),
    )(x_flat, pool_mat, gap_mat, w1a, b1a, w2a, b2a, w1b, b1b, w2b, b2b, wfc, bfc)


# ------------------------------------------------------------------ pure-JAX reference

def _leaky_ref(v):
    return jnp.where(v > 0, v, LEAKY_SLOPE * v)


def _resblock_ref(x, p):
    w1, b1 = p["w1b1"]
    w2, b2 = p["w2b2"]
    h = _leaky_ref(x @ w1 + b1)
    h = h @ w2 + b2 + x
    return _leaky_ref(h)


def task_block_reference(x_nchw, params):
    N, C, H, W = x_nchw.shape
    x = jnp.transpose(x_nchw, (0, 2, 3, 1)).astype(jnp.float32)       # (N, H, W, C)
    h = _resblock_ref(x.reshape(N * H * W, C), params["rb1"]).reshape(N, H, W, C)
    p = 0.25 * (h[:, :-1, :-1] + h[:, 1:, :-1] + h[:, :-1, 1:] + h[:, 1:, 1:])
    Hp, Wp = H - 1, W - 1
    h2 = _resblock_ref(p.reshape(N * Hp * Wp, C), params["rb2"])
    g = h2.reshape(N, Hp * Wp, C).mean(axis=1)
    wfc, bfc = params["fc"]
    return g @ wfc + bfc


# ------------------------------------------------------------------ params

def init_task_params(key, c_in, c_out):
    keys = iter(jax.random.split(key, 32))

    def nk():
        return next(keys)

    def conv_p(cin, cout, scale=0.2):
        w = scale * jax.random.normal(nk(), (cin, cout), dtype=jnp.float32)
        b = scale * jax.random.normal(nk(), (1, cout), dtype=jnp.float32)
        return w, b

    def conv_bn_fold(cin, cout, scale=0.2):
        # 1x1 conv + BatchNorm2d (eval mode, running stats) folded into one affine matmul.
        w, b = conv_p(cin, cout, scale)
        gamma = 1.0 + 0.1 * jax.random.normal(nk(), (cout,), dtype=jnp.float32)
        beta = 0.1 * jax.random.normal(nk(), (cout,), dtype=jnp.float32)
        mean = 0.1 * jax.random.normal(nk(), (cout,), dtype=jnp.float32)
        var = 1.0 + 0.5 * jax.random.uniform(nk(), (cout,), dtype=jnp.float32)
        s = gamma / jnp.sqrt(var + 1e-5)
        return w * s[None, :], (b - mean[None, :]) * s[None, :] + beta[None, :]

    def resblock_p(c):
        return dict(w1b1=conv_bn_fold(c, c), w2b2=conv_bn_fold(c, c))

    return dict(rb1=resblock_p(c_in), rb2=resblock_p(c_in), fc=conv_p(c_in, c_out))


# ------------------------------------------------------------------ main

if __name__ == "__main__":
    # Shapes consistent with how Task_Block is used in the parent model
    # (in_channels=47 feature maps on a small hex grid).
    N, C, H, W, O = 2, 47, 6, 6, 3

    key = jax.random.PRNGKey(0)
    k_par, k_x = jax.random.split(key)

    params = init_task_params(k_par, C, O)
    x = jax.random.normal(k_x, (N, C, H, W), dtype=jnp.float32)

    fwd = jax.jit(task_block_forward)
    out = fwd(x, params)
    jax.block_until_ready(out)

    ref = task_block_reference(x, params)

    assert out.shape == (N, O)
    assert bool(jnp.all(jnp.isfinite(out)))
    assert bool(jnp.allclose(out, ref, rtol=2e-3, atol=2e-3))

    print("KERNEL_OK")
</pallas_src>

<mosaic_0001>
module attributes {stable_mosaic.version = 11 : i64} {
  func.func @_task_block_kernel(%arg0: memref<72x47xf32, #tpu.memory_space<vmem>>, %arg1: memref<50x72xf32, #tpu.memory_space<vmem>>, %arg2: memref<2x50xf32, #tpu.memory_space<vmem>>, %arg3: memref<47x47xf32, #tpu.memory_space<vmem>>, %arg4: memref<1x47xf32, #tpu.memory_space<vmem>>, %arg5: memref<47x47xf32, #tpu.memory_space<vmem>>, %arg6: memref<1x47xf32, #tpu.memory_space<vmem>>, %arg7: memref<47x47xf32, #tpu.memory_space<vmem>>, %arg8: memref<1x47xf32, #tpu.memory_space<vmem>>, %arg9: memref<47x47xf32, #tpu.memory_space<vmem>>, %arg10: memref<1x47xf32, #tpu.memory_space<vmem>>, %arg11: memref<47x3xf32, #tpu.memory_space<vmem>>, %arg12: memref<1x3xf32, #tpu.memory_space<vmem>>, %arg13: memref<2x3xf32, #tpu.memory_space<vmem>>) attributes {dimension_semantics = [], scalar_prefetch = 0 : i64, scratch_operands = 0 : i64, tpu.core_type = #tpu.core_type<tc>} {
    %c0 = arith.constant 0 : index
    %c0_0 = arith.constant 0 : index
    %0 = vector.load %arg0[%c0, %c0_0] : memref<72x47xf32, #tpu.memory_space<vmem>>, vector<72x47xf32>
    %c0_1 = arith.constant 0 : index
    %c0_2 = arith.constant 0 : index
    %1 = vector.load %arg3[%c0_1, %c0_2] : memref<47x47xf32, #tpu.memory_space<vmem>>, vector<47x47xf32>
    %c0_3 = arith.constant 0 : index
    %c0_4 = arith.constant 0 : index
    %2 = vector.load %arg4[%c0_3, %c0_4] : memref<1x47xf32, #tpu.memory_space<vmem>>, vector<1x47xf32>
    %c0_5 = arith.constant 0 : index
    %c0_6 = arith.constant 0 : index
    %3 = vector.load %arg5[%c0_5, %c0_6] : memref<47x47xf32, #tpu.memory_space<vmem>>, vector<47x47xf32>
    %c0_7 = arith.constant 0 : index
    %c0_8 = arith.constant 0 : index
    %4 = vector.load %arg6[%c0_7, %c0_8] : memref<1x47xf32, #tpu.memory_space<vmem>>, vector<1x47xf32>
    %cst = arith.constant dense<0.000000e+00> : vector<72x47xf32>
    %5 = tpu.matmul %0, %1, %cst {dimension_numbers = #tpu.dot_dimension_numbers<[1], [0], [0], [1], [0, 0, 1, 1], [], []>} : vector<72x47xf32>, vector<47x47xf32>, vector<72x47xf32> -> vector<72x47xf32>
    %6 = vector.broadcast %2 : vector<1x47xf32> to vector<72x47xf32>
    %7 = arith.addf %5, %6 : vector<72x47xf32>
    %cst_9 = arith.constant 0.000000e+00 : f32
    %8 = vector.broadcast %cst_9 : f32 to vector<72x47xf32>
    %9 = arith.cmpf ogt, %7, %8 : vector<72x47xf32>
    %cst_10 = arith.constant 0.00999999977 : f32
    %10 = vector.broadcast %cst_10 : f32 to vector<72x47xf32>
    %11 = arith.mulf %10, %7 : vector<72x47xf32>
    %12 = arith.select %9, %7, %11 : vector<72x47xi1>, vector<72x47xf32>
    %cst_11 = arith.constant dense<0.000000e+00> : vector<72x47xf32>
    %13 = tpu.matmul %12, %3, %cst_11 {dimension_numbers = #tpu.dot_dimension_numbers<[1], [0], [0], [1], [0, 0, 1, 1], [], []>} : vector<72x47xf32>, vector<47x47xf32>, vector<72x47xf32> -> vector<72x47xf32>
    %14 = vector.broadcast %4 : vector<1x47xf32> to vector<72x47xf32>
    %15 = arith.addf %13, %14 : vector<72x47xf32>
    %16 = arith.addf %15, %0 : vector<72x47xf32>
    %cst_12 = arith.constant 0.000000e+00 : f32
    %17 = vector.broadcast %cst_12 : f32 to vector<72x47xf32>
    %18 = arith.cmpf ogt, %16, %17 : vector<72x47xf32>
    %cst_13 = arith.constant 0.00999999977 : f32
    %19 = vector.broadcast %cst_13 : f32 to vector<72x47xf32>
    %20 = arith.mulf %19, %16 : vector<72x47xf32>
    %21 = arith.select %18, %16, %20 : vector<72x47xi1>, vector<72x47xf32>
    %c0_14 = arith.constant 0 : index
    %c0_15 = arith.constant 0 : index
    %22 = vector.load %arg1[%c0_14, %c0_15] : memref<50x72xf32, #tpu.memory_space<vmem>>, vector<50x72xf32>
    %cst_16 = arith.constant dense<0.000000e+00> : vector<50x47xf32>
    %23 = tpu.matmul %22, %21, %cst_16 {dimension_numbers = #tpu.dot_dimension_numbers<[1], [0], [0], [1], [0, 0, 1, 1], [], []>} : vector<50x72xf32>, vector<72x47xf32>, vector<50x47xf32> -> vector<50x47xf32>
    %c0_17 = arith.constant 0 : index
    %c0_18 = arith.constant 0 : index
    %24 = vector.load %arg7[%c0_17, %c0_18] : memref<47x47xf32, #tpu.memory_space<vmem>>, vector<47x47xf32>
    %c0_19 = arith.constant 0 : index
    %c0_20 = arith.constant 0 : index
    %25 = vector.load %arg8[%c0_19, %c0_20] : memref<1x47xf32, #tpu.memory_space<vmem>>, vector<1x47xf32>
    %c0_21 = arith.constant 0 : index
    %c0_22 = arith.constant 0 : index
    %26 = vector.load %arg9[%c0_21, %c0_22] : memref<47x47xf32, #tpu.memory_space<vmem>>, vector<47x47xf32>
    %c0_23 = arith.constant 0 : index
    %c0_24 = arith.constant 0 : index
    %27 = vector.load %arg10[%c0_23, %c0_24] : memref<1x47xf32, #tpu.memory_space<vmem>>, vector<1x47xf32>
    %cst_25 = arith.constant dense<0.000000e+00> : vector<50x47xf32>
    %28 = tpu.matmul %23, %24, %cst_25 {dimension_numbers = #tpu.dot_dimension_numbers<[1], [0], [0], [1], [0, 0, 1, 1], [], []>} : vector<50x47xf32>, vector<47x47xf32>, vector<50x47xf32> -> vector<50x47xf32>
    %29 = vector.broadcast %25 : vector<1x47xf32> to vector<50x47xf32>
    %30 = arith.addf %28, %29 : vector<50x47xf32>
    %cst_26 = arith.constant 0.000000e+00 : f32
    %31 = vector.broadcast %cst_26 : f32 to vector<50x47xf32>
    %32 = arith.cmpf ogt, %30, %31 : vector<50x47xf32>
    %cst_27 = arith.constant 0.00999999977 : f32
    %33 = vector.broadcast %cst_27 : f32 to vector<50x47xf32>
    %34 = arith.mulf %33, %30 : vector<50x47xf32>
    %35 = arith.select %32, %30, %34 : vector<50x47xi1>, vector<50x47xf32>
    %cst_28 = arith.constant dense<0.000000e+00> : vector<50x47xf32>
    %36 = tpu.matmul %35, %26, %cst_28 {dimension_numbers = #tpu.dot_dimension_numbers<[1], [0], [0], [1], [0, 0, 1, 1], [], []>} : vector<50x47xf32>, vector<47x47xf32>, vector<50x47xf32> -> vector<50x47xf32>
    %37 = vector.broadcast %27 : vector<1x47xf32> to vector<50x47xf32>
    %38 = arith.addf %36, %37 : vector<50x47xf32>
    %39 = arith.addf %38, %23 : vector<50x47xf32>
    %cst_29 = arith.constant 0.000000e+00 : f32
    %40 = vector.broadcast %cst_29 : f32 to vector<50x47xf32>
    %41 = arith.cmpf ogt, %39, %40 : vector<50x47xf32>
    %cst_30 = arith.constant 0.00999999977 : f32
    %42 = vector.broadcast %cst_30 : f32 to vector<50x47xf32>
    %43 = arith.mulf %42, %39 : vector<50x47xf32>
    %44 = arith.select %41, %39, %43 : vector<50x47xi1>, vector<50x47xf32>
    %c0_31 = arith.constant 0 : index
    %c0_32 = arith.constant 0 : index
    %45 = vector.load %arg2[%c0_31, %c0_32] : memref<2x50xf32, #tpu.memory_space<vmem>>, vector<2x50xf32>
    %cst_33 = arith.constant dense<0.000000e+00> : vector<2x47xf32>
    %46 = tpu.matmul %45, %44, %cst_33 {dimension_numbers = #tpu.dot_dimension_numbers<[1], [0], [0], [1], [0, 0, 1, 1], [], []>} : vector<2x50xf32>, vector<50x47xf32>, vector<2x47xf32> -> vector<2x47xf32>
    %c0_34 = arith.constant 0 : index
    %c0_35 = arith.constant 0 : index
    %47 = vector.load %arg11[%c0_34, %c0_35] : memref<47x3xf32, #tpu.memory_space<vmem>>, vector<47x3xf32>
    %cst_36 = arith.constant dense<0.000000e+00> : vector<2x3xf32>
    %48 = tpu.matmul %46, %47, %cst_36 {dimension_numbers = #tpu.dot_dimension_numbers<[1], [0], [0], [1], [0, 0, 1, 1], [], []>} : vector<2x47xf32>, vector<47x3xf32>, vector<2x3xf32> -> vector<2x3xf32>
    %c0_37 = arith.constant 0 : index
    %c0_38 = arith.constant 0 : index
    %49 = vector.load %arg12[%c0_37, %c0_38] : memref<1x3xf32, #tpu.memory_space<vmem>>, vector<1x3xf32>
    %50 = vector.broadcast %49 : vector<1x3xf32> to vector<2x3xf32>
    %51 = arith.addf %48, %50 : vector<2x3xf32>
    %c0_39 = arith.constant 0 : index
    %c0_40 = arith.constant 0 : index
    %52 = vector.load %arg13[%c0_39, %c0_40] : memref<2x3xf32, #tpu.memory_space<vmem>>, vector<2x3xf32>
    tpu.vector_store %arg13[%c0_39, %c0_40], %51 {strides = array<i32>} : memref<2x3xf32, #tpu.memory_space<vmem>>, vector<2x3xf32>,
    return
  }
}

</mosaic_0001>

<llo_original>
// kernel: task_block_forward.1
$region0: #{task_block_forward.1}
  #allocation0 [shape = 'u32[]', space=smem, size = 0x4, offset = 0x4, fixed_abs, tag = 'smem constant byte address 0x4 - core index']
  #allocation1 [shape = 'u32[144,128]{1,0:T(1,128)}', space=vmem, size = 0x12000, scoped, tag = 'internal scratch']
  %s0 = inlined_call_operand.vmem [shape: f32[72,47], index: 0, kind: input, shape index: {}]
  %s1 = inlined_call_operand.vmem [shape: f32[50,72], index: 1, kind: input, shape index: {}]
  %s2 = inlined_call_operand.vmem [shape: f32[2,50], index: 2, kind: input, shape index: {}]
  %s3 = inlined_call_operand.vmem [shape: f32[47,47], index: 3, kind: input, shape index: {}]
  %s4 = inlined_call_operand.vmem [shape: f32[1,47], index: 4, kind: input, shape index: {}]
  %s5 = inlined_call_operand.vmem [shape: f32[47,47], index: 5, kind: input, shape index: {}]
  %s6 = inlined_call_operand.vmem [shape: f32[1,47], index: 6, kind: input, shape index: {}]
  %s7 = inlined_call_operand.vmem [shape: f32[47,47], index: 7, kind: input, shape index: {}]
  %s8 = inlined_call_operand.vmem [shape: f32[1,47], index: 8, kind: input, shape index: {}]
  %s9 = inlined_call_operand.vmem [shape: f32[47,47], index: 9, kind: input, shape index: {}]
  %s10 = inlined_call_operand.vmem [shape: f32[1,47], index: 10, kind: input, shape index: {}]
  %s11 = inlined_call_operand.vmem [shape: f32[47,3], index: 11, kind: input, shape index: {}]
  %s12 = inlined_call_operand.vmem [shape: f32[1,3], index: 12, kind: input, shape index: {}]
  %s13 = inlined_call_operand.hbm [shape: f32[2,3], index: 13, kind: output, shape index: {}]
  %s14 = sld [smem:[#allocation0]]
  $region62: #{task_block_forward.1} parent=0
    _
  %s16 = ssub.s32 1, %s14
  %s17 = scalar_select 0, %s16, %s14
  $region1: #{task_block_forward.1} parent=0
    #allocation2 [shape = 'u8[1024]{0}', space=vmem, size = 0x400, scoped, tag = 'output window, operand 0, single buffered']
    #allocation3 [shape = 's32[1]{0}', space=sflag, size = 0x4, scoped, tag = 'scoped memory for task_block_forward.1']
    %18 = vsyncpa [#allocation3], 0
    // Predicated region
    $region2: #{task_block_forward.1} parent=1 // pred_check
      _
    $region3: #{task_block_forward.1} parent=1 // pred_check_branch
      %20 = sbr.rel (0) target = $region5
    $region4: #{task_block_forward.1} parent=1 // pred_region
      _
    $region5: #{task_block_forward.1} parent=1 // pred_fallthru
      _
    // Predicated region
    $region6: #{task_block_forward.1} parent=1 // pred_check
      _
    $region7: #{task_block_forward.1} parent=1 // pred_check_branch
      %22 = sbr.rel (0) target = $region9
    $region8: #{task_block_forward.1} parent=1 // pred_region
      _
    $region9: #{task_block_forward.1} parent=1 // pred_fallthru
      _
    // Predicated region
    $region10: #{task_block_forward.1} parent=1 // pred_check
      _
    $region11: #{task_block_forward.1} parent=1 // pred_check_branch
      %24 = sbr.rel (0) target = $region13
    $region12: #{task_block_forward.1} parent=1 // pred_region
      _
    $region13: #{task_block_forward.1} parent=1 // pred_fallthru
      _
    // Predicated region
    $region14: #{task_block_forward.1} parent=1 // pred_check
      _
    $region15: #{task_block_forward.1} parent=1 // pred_check_branch
      %26 = sbr.rel (0) target = $region17
    $region16: #{task_block_forward.1} parent=1 // pred_region
      _
    $region17: #{task_block_forward.1} parent=1 // pred_fallthru
      _
    // Predicated region
    $region18: #{task_block_forward.1} parent=1 // pred_check
      _
    $region19: #{task_block_forward.1} parent=1 // pred_check_branch
      %28 = sbr.rel (0) target = $region21
    $region20: #{task_block_forward.1} parent=1 // pred_region
      _
    $region21: #{task_block_forward.1} parent=1 // pred_fallthru
      _
    // Predicated region
    $region22: #{task_block_forward.1} parent=1 // pred_check
      _
    $region23: #{task_block_forward.1} parent=1 // pred_check_branch
      %30 = sbr.rel (0) target = $region25
    $region24: #{task_block_forward.1} parent=1 // pred_region
      _
    $region25: #{task_block_forward.1} parent=1 // pred_fallthru
      _
    // Predicated region
    $region26: #{task_block_forward.1} parent=1 // pred_check
      _
    $region27: #{task_block_forward.1} parent=1 // pred_check_branch
      %32 = sbr.rel (0) target = $region29
    $region28: #{task_block_forward.1} parent=1 // pred_region
      _
    $region29: #{task_block_forward.1} parent=1 // pred_fallthru
      _
    // Predicated region
    $region30: #{task_block_forward.1} parent=1 // pred_check
      _
    $region31: #{task_block_forward.1} parent=1 // pred_check_branch
      %34 = sbr.rel (0) target = $region33
    $region32: #{task_block_forward.1} parent=1 // pred_region
      _
    $region33: #{task_block_forward.1} parent=1 // pred_fallthru
      _
    // Predicated region
    $region34: #{task_block_forward.1} parent=1 // pred_check
      _
    $region35: #{task_block_forward.1} parent=1 // pred_check_branch
      %36 = sbr.rel (0) target = $region37
    $region36: #{task_block_forward.1} parent=1 // pred_region
      _
    $region37: #{task_block_forward.1} parent=1 // pred_fallthru
      _
    // Predicated region
    $region38: #{task_block_forward.1} parent=1 // pred_check
      _
    $region39: #{task_block_forward.1} parent=1 // pred_check_branch
      %38 = sbr.rel (0) target = $region41
    $region40: #{task_block_forward.1} parent=1 // pred_region
      _
    $region41: #{task_block_forward.1} parent=1 // pred_fallthru
      _
    // Predicated region
    $region42: #{task_block_forward.1} parent=1 // pred_check
      _
    $region43: #{task_block_forward.1} parent=1 // pred_check_branch
      %40 = sbr.rel (0) target = $region45
    $region44: #{task_block_forward.1} parent=1 // pred_region
      _
    $region45: #{task_block_forward.1} parent=1 // pred_fallthru
      _
    // Predicated region
    $region46: #{task_block_forward.1} parent=1 // pred_check
      _
    $region47: #{task_block_forward.1} parent=1 // pred_check_branch
      %42 = sbr.rel (0) target = $region49
    $region48: #{task_block_forward.1} parent=1 // pred_region
      _
    $region49: #{task_block_forward.1} parent=1 // pred_fallthru
      _
    // Predicated region
    $region50: #{task_block_forward.1} parent=1 // pred_check
      _
    $region51: #{task_block_forward.1} parent=1 // pred_check_branch
      %44 = sbr.rel (0) target = $region53
    $region52: #{task_block_forward.1} parent=1 // pred_region
      _
    $region53: #{task_block_forward.1} parent=1 // pred_fallthru
      _
    %v45 = vld [vmem:[%s0] sm:$0xff]
    %v46 = vld [vmem:[%s0 + $0x8] sm:$0xff]
    %v47 = vld [vmem:[%s0 + $0x10] sm:$0xff]
    %v48 = vld [vmem:[%s0 + $0x18] sm:$0xff]
    %v49 = vld [vmem:[%s0 + $0x20] sm:$0xff]
    %v50 = vld [vmem:[%s0 + $0x28] sm:$0xff]
    %v51 = vld [vmem:[%s0 + $0x30] sm:$0xff]
    %v52 = vld [vmem:[%s0 + $0x38] sm:$0xff]
    %v53 = vld [vmem:[%s0 + $0x40] sm:$0xff]
    %v54 = vld [vmem:[%s3] sm:$0xff]
    %v55 = vld [vmem:[%s3 + $0x8] sm:$0xff]
    %v56 = vld [vmem:[%s3 + $0x10] sm:$0xff]
    %v57 = vld [vmem:[%s3 + $0x18] sm:$0xff]
    %v58 = vld [vmem:[%s3 + $0x20] sm:$0xff]
    %v59 = vld [vmem:[%s3 + $0x28] sm:$0x7f]
    %v60 = vld [vmem:[%s4] sm:$0x1]
    %v61 = vld [vmem:[%s5] sm:$0xff]
    %v62 = vld [vmem:[%s5 + $0x8] sm:$0xff]
    %v63 = vld [vmem:[%s5 + $0x10] sm:$0xff]
    %v64 = vld [vmem:[%s5 + $0x18] sm:$0xff]
    %v65 = vld [vmem:[%s5 + $0x20] sm:$0xff]
    %v66 = vld [vmem:[%s5 + $0x28] sm:$0x7f]
    %v67 = vld [vmem:[%s6] sm:$0x1]
    %v69 = vlaneseq
    %v70 = vshrl.u32 %v69, 7
    %v71 = vsub.s32 0, %v70
    %v72 = vrot.slane %v60, %v71
    %vm74 = vcmask 384000
    %v76 = vsel %vm74, %v45, 0
    %v79 = vsel %vm74, %v46, 0
    %v82 = vsel %vm74, %v47, 0
    %v85 = vsel %vm74, %v48, 0
    %v88 = vsel %vm74, %v49, 0
    %v91 = vsel %vm74, %v50, 0
    %v94 = vsel %vm74, %v51, 0
    %v97 = vsel %vm74, %v52, 0
    %v100 = vsel %vm74, %v53, 0
    %vm102 = vcmask 1046528
    %v104 = vsel %vm102, %v59, 0
    %106 = vmatprep.subr.mxu0 0.0
    %107 = vmatpush1.msra.mxu0 %v54
    %108 = vmatprep.subr.mxu0 0.0
    %109 = vmatpush1.msra.mxu0 %v55
    %110 = vmatprep.subr.mxu0 0.0
    %111 = vmatpush1.msra.mxu0 %v56
    %112 = vmatprep.subr.mxu0 0.0
    %113 = vmatpush1.msra.mxu0 %v57
    %114 = vmatprep.subr.mxu0 0.0
    %115 = vmatpush1.msra.mxu0 %v58
    %116 = vmatprep.subr.mxu0 0.0
    %117 = vmatpush1.msra.mxu0 %v104
    %118 = vmatprep.subr.mxu0 0.0
    %119 = vmatpush1.msra.mxu0 0.0
    %120 = vmatprep.subr.mxu0 0.0
    %121 = vmatpush1.msra.mxu0 0.0
    %122 = vmatprep.subr.mxu0 0.0
    %123 = vmatpush1.msra.mxu0 0.0
    %124 = vmatprep.subr.mxu0 0.0
    %125 = vmatpush1.msra.mxu0 0.0
    %126 = vmatprep.subr.mxu0 0.0
    %127 = vmatpush1.msra.mxu0 0.0
    %128 = vmatprep.subr.mxu0 0.0
    %129 = vmatpush1.msra.mxu0 0.0
    %130 = vmatprep.subr.mxu0 0.0
    %131 = vmatpush1.msra.mxu0 0.0
    %132 = vmatprep.subr.mxu0 0.0
    %133 = vmatpush1.msra.mxu0 0.0
    %134 = vmatprep.subr.mxu0 0.0
    %135 = vmatpush1.msra.mxu0 0.0
    %136 = vmatprep.subr.mxu0 0.0
    %137 = vmatpush1.msra.mxu0 0.0
    %138 = vmatprep.subr.mxu0 0.0
    %139 = vmatpush1.msra.mxu0 0.0
    %140 = vmatprep.subr.mxu0 0.0
    %141 = vmatpush1.msra.mxu0 0.0
    %142 = vmatprep.subr.mxu0 0.0
    %143 = vmatpush1.msra.mxu0 0.0
    %144 = vmatprep.subr.mxu0 0.0
    %145 = vmatpush1.msra.mxu0 0.0
    %146 = vmatprep.subr.mxu0 0.0
    %147 = vmatpush1.msra.mxu0 0.0
    %148 = vmatprep.subr.mxu0 0.0
    %149 = vmatpush1.msra.mxu0 0.0
    %150 = vmatprep.subr.mxu0 0.0
    %151 = vmatpush1.msra.mxu0 0.0
    %152 = vmatprep.subr.mxu0 0.0
    %153 = vmatpush1.msra.mxu0 0.0
    %154 = vmatprep.subr.mxu0 0.0
    %155 = vmatpush1.msra.mxu0 0.0
    %156 = vmatprep.subr.mxu0 0.0
    %157 = vmatpush1.msra.mxu0 0.0
    %158 = vmatprep.subr.mxu0 0.0
    %159 = vmatpush1.msra.mxu0 0.0
    %160 = vmatprep.subr.mxu0 0.0
    %161 = vmatpush1.msra.mxu0 0.0
    %162 = vmatprep.subr.mxu0 0.0
    %163 = vmatpush1.msra.mxu0 0.0
    %164 = vmatprep.subr.mxu0 0.0
    %165 = vmatpush1.msra.mxu0 0.0
    %166 = vmatprep.subr.mxu0 0.0
    %167 = vmatpush1.msra.mxu0 0.0
    %168 = vmatprep.subr.mxu0 0.0
    %169 = vmatpush1.msra.mxu0 0.0
    %170 = vmatprep.mubr.f32.mxu0 0.0
    %171 = vmatmul.mubr.f32.gmra.mrb[0].mxu0 %v76
    %v172 = vpop.f32.mrb[0].mxu0
    %v173 = vadd.f32 %v72, %v172
    %v174 = vpop.f32.mrb[0].mxu0
    %175 = vmatprep.mubr.f32.mxu0 0.0
    %176 = vmatmul.mubr.f32.gmra.mrb[0].mxu0 %v79
    %v177 = vpop.f32.mrb[0].mxu0
    %v178 = vadd.f32 %v72, %v177
    %v179 = vpop.f32.mrb[0].mxu0
    %180 = vmatprep.mubr.f32.mxu0 0.0
    %181 = vmatmul.mubr.f32.gmra.mrb[0].mxu0 %v82
    %v182 = vpop.f32.mrb[0].mxu0
    %v183 = vadd.f32 %v72, %v182
    %v184 = vpop.f32.mrb[0].mxu0
    %185 = vmatprep.mubr.f32.mxu0 0.0
    %186 = vmatmul.mubr.f32.gmra.mrb[0].mxu0 %v85
    %v187 = vpop.f32.mrb[0].mxu0
    %v188 = vadd.f32 %v72, %v187
    %v189 = vpop.f32.mrb[0].mxu0
    %190 = vmatprep.mubr.f32.mxu0 0.0
    %191 = vmatmul.mubr.f32.gmra.mrb[0].mxu0 %v88
    %v192 = vpop.f32.mrb[0].mxu0
    %v193 = vadd.f32 %v72, %v192
    %v194 = vpop.f32.mrb[0].mxu0
    %195 = vmatprep.mubr.f32.mxu0 0.0
    %196 = vmatmul.mubr.f32.gmra.mrb[0].mxu0 %v91
    %v197 = vpop.f32.mrb[0].mxu0
    %v198 = vadd.f32 %v72, %v197
    %v199 = vpop.f32.mrb[0].mxu0
    %200 = vmatprep.mubr.f32.mxu0 0.0
    %201 = vmatmul.mubr.f32.gmra.mrb[0].mxu0 %v94
    %v202 = vpop.f32.mrb[0].mxu0
    %v203 = vadd.f32 %v72, %v202
    %v204 = vpop.f32.mrb[0].mxu0
    %205 = vmatprep.mubr.f32.mxu0 0.0
    %206 = vmatmul.mubr.f32.gmra.mrb[0].mxu0 %v97
    %v207 = vpop.f32.mrb[0].mxu0
    %v208 = vadd.f32 %v72, %v207
    %v209 = vpop.f32.mrb[0].mxu0
    %210 = vmatprep.mubr.f32.mxu0 0.0
    %211 = vmatmul.mubr.f32.gmra.mrb[0].mxu0 %v100
    %v212 = vpop.f32.mrb[0].mxu0
    %v213 = vadd.f32 %v72, %v212
    %v214 = vpop.f32.mrb[0].mxu0
    %215 = vdwg.mxu0
    %vm216 = vcmp.gt.f32.partialorder %v173, 0.0
    %vm217 = vcmp.gt.f32.partialorder %v178, 0.0
    %vm218 = vcmp.gt.f32.partialorder %v183, 0.0
    %vm219 = vcmp.gt.f32.partialorder %v188, 0.0
    %vm220 = vcmp.gt.f32.partialorder %v193, 0.0
    %vm221 = vcmp.gt.f32.partialorder %v198, 0.0
    %vm222 = vcmp.gt.f32.partialorder %v203, 0.0
    %vm223 = vcmp.gt.f32.partialorder %v208, 0.0
    %vm224 = vcmp.gt.f32.partialorder %v213, 0.0
    %v225 = vmul.f32 %v173, 0.01
    %v226 = vmul.f32 %v178, 0.01
    %v227 = vmul.f32 %v183, 0.01
    %v228 = vmul.f32 %v188, 0.01
    %v229 = vmul.f32 %v193, 0.01
    %v230 = vmul.f32 %v198, 0.01
    %v231 = vmul.f32 %v203, 0.01
    %v232 = vmul.f32 %v208, 0.01
    %v233 = vmul.f32 %v213, 0.01
    %v234 = vsel %vm216, %v173, %v225
    %v235 = vsel %vm217, %v178, %v226
    %v236 = vsel %vm218, %v183, %v227
    %v237 = vsel %vm219, %v188, %v228
    %v238 = vsel %vm220, %v193, %v229
    %v239 = vsel %vm221, %v198, %v230
    %v240 = vsel %vm222, %v203, %v231
    %v241 = vsel %vm223, %v208, %v232
    %v242 = vsel %vm224, %v213, %v233
    %v244 = vlaneseq
    %v245 = vshrl.u32 %v244, 7
    %v246 = vsub.s32 0, %v245
    %v247 = vrot.slane %v67, %v246
    %v250 = vsel %vm74, %v234, 0
    %v253 = vsel %vm74, %v235, 0
    %v256 = vsel %vm74, %v236, 0
    %v259 = vsel %vm74, %v237, 0
    %v262 = vsel %vm74, %v238, 0
    %v265 = vsel %vm74, %v239, 0
    %v268 = vsel %vm74, %v240, 0
    %v271 = vsel %vm74, %v241, 0
    %v274 = vsel %vm74, %v242, 0
    %v277 = vsel %vm102, %v66, 0
    %279 = vmatprep.subr.mxu0 0.0
    %280 = vmatpush1.msra.mxu0 %v61
    %281 = vmatprep.subr.mxu0 0.0
    %282 = vmatpush1.msra.mxu0 %v62
    %283 = vmatprep.subr.mxu0 0.0
    %284 = vmatpush1.msra.mxu0 %v63
    %285 = vmatprep.subr.mxu0 0.0
    %286 = vmatpush1.msra.mxu0 %v64
    %287 = vmatprep.subr.mxu0 0.0
    %288 = vmatpush1.msra.mxu0 %v65
    %289 = vmatprep.subr.mxu0 0.0
    %290 = vmatpush1.msra.mxu0 %v277
    %291 = vmatprep.subr.mxu0 0.0
    %292 = vmatpush1.msra.mxu0 0.0
    %293 = vmatprep.subr.mxu0 0.0
    %294 = vmatpush1.msra.mxu0 0.0
    %295 = vmatprep.subr.mxu0 0.0
    %296 = vmatpush1.msra.mxu0 0.0
    %297 = vmatprep.subr.mxu0 0.0
    %298 = vmatpush1.msra.mxu0 0.0
    %299 = vmatprep.subr.mxu0 0.0
    %300 = vmatpush1.msra.mxu0 0.0
    %301 = vmatprep.subr.mxu0 0.0
    %302 = vmatpush1.msra.mxu0 0.0
    %303 = vmatprep.subr.mxu0 0.0
    %304 = vmatpush1.msra.mxu0 0.0
    %305 = vmatprep.subr.mxu0 0.0
    %306 = vmatpush1.msra.mxu0 0.0
    %307 = vmatprep.subr.mxu0 0.0
    %308 = vmatpush1.msra.mxu0 0.0
    %309 = vmatprep.subr.mxu0 0.0
    %310 = vmatpush1.msra.mxu0 0.0
    %311 = vmatprep.subr.mxu0 0.0
    %312 = vmatpush1.msra.mxu0 0.0
    %313 = vmatprep.subr.mxu0 0.0
    %314 = vmatpush1.msra.mxu0 0.0
    %315 = vmatprep.subr.mxu0 0.0
    %316 = vmatpush1.msra.mxu0 0.0
    %317 = vmatprep.subr.mxu0 0.0
    %318 = vmatpush1.msra.mxu0 0.0
    %319 = vmatprep.subr.mxu0 0.0
    %320 = vmatpush1.msra.mxu0 0.0
    %321 = vmatprep.subr.mxu0 0.0
    %322 = vmatpush1.msra.mxu0 0.0
    %323 = vmatprep.subr.mxu0 0.0
    %324 = vmatpush1.msra.mxu0 0.0
    %325 = vmatprep.subr.mxu0 0.0
    %326 = vmatpush1.msra.mxu0 0.0
    %327 = vmatprep.subr.mxu0 0.0
    %328 = vmatpush1.msra.mxu0 0.0
    %329 = vmatprep.subr.mxu0 0.0
    %330 = vmatpush1.msra.mxu0 0.0
    %331 = vmatprep.subr.mxu0 0.0
    %332 = vmatpush1.msra.mxu0 0.0
    %333 = vmatprep.subr.mxu0 0.0
    %334 = vmatpush1.msra.mxu0 0.0
    %335 = vmatprep.subr.mxu0 0.0
    %336 = vmatpush1.msra.mxu0 0.0
    %337 = vmatprep.subr.mxu0 0.0
    %338 = vmatpush1.msra.mxu0 0.0
    %339 = vmatprep.subr.mxu0 0.0
    %340 = vmatpush1.msra.mxu0 0.0
    %341 = vmatprep.subr.mxu0 0.0
    %342 = vmatpush1.msra.mxu0 0.0
    %343 = vmatprep.mubr.f32.mxu0 0.0
    %344 = vmatmul.mubr.f32.gmra.mrb[0].mxu0 %v250
    %v345 = vpop.f32.mrb[0].mxu0
    %v346 = vadd.f32 %v247, %v345
    %v347 = vpop.f32.mrb[0].mxu0
    %348 = vmatprep.mubr.f32.mxu0 0.0
    %349 = vmatmul.mubr.f32.gmra.mrb[0].mxu0 %v253
    %v350 = vpop.f32.mrb[0].mxu0
    %v351 = vadd.f32 %v247, %v350
    %v352 = vpop.f32.mrb[0].mxu0
    %353 = vmatprep.mubr.f32.mxu0 0.0
    %354 = vmatmul.mubr.f32.gmra.mrb[0].mxu0 %v256
    %v355 = vpop.f32.mrb[0].mxu0
    %v356 = vadd.f32 %v247, %v355
    %v357 = vpop.f32.mrb[0].mxu0
    %358 = vmatprep.mubr.f32.mxu0 0.0
    %359 = vmatmul.mubr.f32.gmra.mrb[0].mxu0 %v259
    %v360 = vpop.f32.mrb[0].mxu0
    %v361 = vadd.f32 %v247, %v360
    %v362 = vpop.f32.mrb[0].mxu0
    %363 = vmatprep.mubr.f32.mxu0 0.0
    %364 = vmatmul.mubr.f32.gmra.mrb[0].mxu0 %v262
    %v365 = vpop.f32.mrb[0].mxu0
    %v366 = vadd.f32 %v247, %v365
    %v367 = vpop.f32.mrb[0].mxu0
    %368 = vmatprep.mubr.f32.mxu0 0.0
    %369 = vmatmul.mubr.f32.gmra.mrb[0].mxu0 %v265
    %v370 = vpop.f32.mrb[0].mxu0
    %v371 = vadd.f32 %v247, %v370
    %v372 = vpop.f32.mrb[0].mxu0
    %373 = vmatprep.mubr.f32.mxu0 0.0
    %374 = vmatmul.mubr.f32.gmra.mrb[0].mxu0 %v268
    %v375 = vpop.f32.mrb[0].mxu0
    %v376 = vadd.f32 %v247, %v375
    %v377 = vpop.f32.mrb[0].mxu0
    %378 = vmatprep.mubr.f32.mxu0 0.0
    %379 = vmatmul.mubr.f32.gmra.mrb[0].mxu0 %v271
    %v380 = vpop.f32.mrb[0].mxu0
    %v381 = vadd.f32 %v247, %v380
    %v382 = vpop.f32.mrb[0].mxu0
    %383 = vmatprep.mubr.f32.mxu0 0.0
    %384 = vmatmul.mubr.f32.gmra.mrb[0].mxu0 %v274
    %v385 = vpop.f32.mrb[0].mxu0
    %v386 = vadd.f32 %v247, %v385
    %v387 = vpop.f32.mrb[0].mxu0
    %388 = vdwg.mxu0
    %v389 = vadd.f32 %v346, %v45
    %v390 = vadd.f32 %v351, %v46
    %v391 = vadd.f32 %v356, %v47
    %v392 = vadd.f32 %v361, %v48
    %v393 = vadd.f32 %v366, %v49
    %v394 = vadd.f32 %v371, %v50
    %v395 = vadd.f32 %v376, %v51
    %v396 = vadd.f32 %v381, %v52
    %v397 = vadd.f32 %v386, %v53
    %vm398 = vcmp.gt.f32.partialorder %v389, 0.0
    %vm399 = vcmp.gt.f32.partialorder %v390, 0.0
    %vm400 = vcmp.gt.f32.partialorder %v391, 0.0
    %vm401 = vcmp.gt.f32.partialorder %v392, 0.0
    %vm402 = vcmp.gt.f32.partialorder %v393, 0.0
    %vm403 = vcmp.gt.f32.partialorder %v394, 0.0
    %vm404 = vcmp.gt.f32.partialorder %v395, 0.0
    %vm405 = vcmp.gt.f32.partialorder %v396, 0.0
    %vm406 = vcmp.gt.f32.partialorder %v397, 0.0
    %v407 = vmul.f32 %v389, 0.01
    %v408 = vmul.f32 %v390, 0.01
    %v409 = vmul.f32 %v391, 0.01
    %v410 = vmul.f32 %v392, 0.01
    %v411 = vmul.f32 %v393, 0.01
    %v412 = vmul.f32 %v394, 0.01
    %v413 = vmul.f32 %v395, 0.01
    %v414 = vmul.f32 %v396, 0.01
    %v415 = vmul.f32 %v397, 0.01
    %v416 = vsel %vm398, %v389, %v407
    %v417 = vsel %vm399, %v390, %v408
    %v418 = vsel %vm400, %v391, %v409
    %v419 = vsel %vm401, %v392, %v410
    %v420 = vsel %vm402, %v393, %v411
    %v421 = vsel %vm403, %v394, %v412
    %v422 = vsel %vm404, %v395, %v413
    %v423 = vsel %vm405, %v396, %v414
    %v424 = vsel %vm406, %v397, %v415
    %v425 = vld [vmem:[%s1] sm:$0xff]
    %v426 = vld [vmem:[%s1 + $0x8] sm:$0xff]
    %v427 = vld [vmem:[%s1 + $0x10] sm:$0xff]
    %v428 = vld [vmem:[%s1 + $0x18] sm:$0xff]
    %v429 = vld [vmem:[%s1 + $0x20] sm:$0xff]
    %v430 = vld [vmem:[%s1 + $0x28] sm:$0xff]
    %v431 = vld [vmem:[%s1 + $0x30] sm:$0x3]
    %vm432 = vcmask 588800
    %v434 = vsel %vm432, %v425, 0
    %v437 = vsel %vm432, %v426, 0
    %v440 = vsel %vm432, %v427, 0
    %v443 = vsel %vm432, %v428, 0
    %v446 = vsel %vm432, %v429, 0
    %v449 = vsel %vm432, %v430, 0
    %v452 = vsel %vm432, %v431, 0
    %454 = vmatprep.subr.mxu0 0.0
    %455 = vmatpush1.msra.mxu0 %v416
    %456 = vmatprep.subr.mxu0 0.0
    %457 = vmatpush1.msra.mxu0 %v417
    %458 = vmatprep.subr.mxu0 0.0
    %459 = vmatpush1.msra.mxu0 %v418
    %460 = vmatprep.subr.mxu0 0.0
    %461 = vmatpush1.msra.mxu0 %v419
    %462 = vmatprep.subr.mxu0 0.0
    %463 = vmatpush1.msra.mxu0 %v420
    %464 = vmatprep.subr.mxu0 0.0
    %465 = vmatpush1.msra.mxu0 %v421
    %466 = vmatprep.subr.mxu0 0.0
    %467 = vmatpush1.msra.mxu0 %v422
    %468 = vmatprep.subr.mxu0 0.0
    %469 = vmatpush1.msra.mxu0 %v423
    %470 = vmatprep.subr.mxu0 0.0
    %471 = vmatpush1.msra.mxu0 %v424
    %472 = vmatprep.subr.mxu0 0.0
    %473 = vmatpush1.msra.mxu0 0.0
    %474 = vmatprep.subr.mxu0 0.0
    %475 = vmatpush1.msra.mxu0 0.0
    %476 = vmatprep.subr.mxu0 0.0
    %477 = vmatpush1.msra.mxu0 0.0
    %478 = vmatprep.subr.mxu0 0.0
    %479 = vmatpush1.msra.mxu0 0.0
    %480 = vmatprep.subr.mxu0 0.0
    %481 = vmatpush1.msra.mxu0 0.0
    %482 = vmatprep.subr.mxu0 0.0
    %483 = vmatpush1.msra.mxu0 0.0
    %484 = vmatprep.subr.mxu0 0.0
    %485 = vmatpush1.msra.mxu0 0.0
    %486 = vmatprep.subr.mxu0 0.0
    %487 = vmatpush1.msra.mxu0 0.0
    %488 = vmatprep.subr.mxu0 0.0
    %489 = vmatpush1.msra.mxu0 0.0
    %490 = vmatprep.subr.mxu0 0.0
    %491 = vmatpush1.msra.mxu0 0.0
    %492 = vmatprep.subr.mxu0 0.0
    %493 = vmatpush1.msra.mxu0 0.0
    %494 = vmatprep.subr.mxu0 0.0
    %495 = vmatpush1.msra.mxu0 0.0
    %496 = vmatprep.subr.mxu0 0.0
    %497 = vmatpush1.msra.mxu0 0.0
    %498 = vmatprep.subr.mxu0 0.0
    %499 = vmatpush1.msra.mxu0 0.0
    %500 = vmatprep.subr.mxu0 0.0
    %501 = vmatpush1.msra.mxu0 0.0
    %502 = vmatprep.subr.mxu0 0.0
    %503 = vmatpush1.msra.mxu0 0.0
    %504 = vmatprep.subr.mxu0 0.0
    %505 = vmatpush1.msra.mxu0 0.0
    %506 = vmatprep.subr.mxu0 0.0
    %507 = vmatpush1.msra.mxu0 0.0
    %508 = vmatprep.subr.mxu0 0.0
    %509 = vmatpush1.msra.mxu0 0.0
    %510 = vmatprep.subr.mxu0 0.0
    %511 = vmatpush1.msra.mxu0 0.0
    %512 = vmatprep.subr.mxu0 0.0
    %513 = vmatpush1.msra.mxu0 0.0
    %514 = vmatprep.subr.mxu0 0.0
    %515 = vmatpush1.msra.mxu0 0.0
    %516 = vmatprep.subr.mxu0 0.0
    %517 = vmatpush1.msra.mxu0 0.0
    %518 = vmatprep.mubr.f32.mxu0 0.0
    %519 = vmatmul.mubr.f32.gmra.mrb[0].mxu0 %v434
    %v520 = vpop.f32.mrb[0].mxu0
    %v521 = vadd.f32 0.0, %v520
    %v522 = vpop.f32.mrb[0].mxu0
    %523 = vmatprep.mubr.f32.mxu0 0.0
    %524 = vmatmul.mubr.f32.gmra.mrb[0].mxu0 %v437
    %v525 = vpop.f32.mrb[0].mxu0
    %v526 = vadd.f32 0.0, %v525
    %v527 = vpop.f32.mrb[0].mxu0
    %528 = vmatprep.mubr.f32.mxu0 0.0
    %529 = vmatmul.mubr.f32.gmra.mrb[0].mxu0 %v440
    %v530 = vpop.f32.mrb[0].mxu0
    %v531 = vadd.f32 0.0, %v530
    %v532 = vpop.f32.mrb[0].mxu0
    %533 = vmatprep.mubr.f32.mxu0 0.0
    %534 = vmatmul.mubr.f32.gmra.mrb[0].mxu0 %v443
    %v535 = vpop.f32.mrb[0].mxu0
    %v536 = vadd.f32 0.0, %v535
    %v537 = vpop.f32.mrb[0].mxu0
    %538 = vmatprep.mubr.f32.mxu0 0.0
    %539 = vmatmul.mubr.f32.gmra.mrb[0].mxu0 %v446
    %v540 = vpop.f32.mrb[0].mxu0
    %v541 = vadd.f32 0.0, %v540
    %v542 = vpop.f32.mrb[0].mxu0
    %543 = vmatprep.mubr.f32.mxu0 0.0
    %544 = vmatmul.mubr.f32.gmra.mrb[0].mxu0 %v449
    %v545 = vpop.f32.mrb[0].mxu0
    %v546 = vadd.f32 0.0, %v545
    %v547 = vpop.f32.mrb[0].mxu0
    %548 = vmatprep.mubr.f32.mxu0 0.0
    %549 = vmatmul.mubr.f32.gmra.mrb[0].mxu0 %v452
    %v550 = vpop.f32.mrb[0].mxu0
    %v551 = vadd.f32 0.0, %v550
    %v552 = vpop.f32.mrb[0].mxu0
    %553 = vdwg.mxu0
    %v554 = vld [vmem:[%s7] sm:$0xff]
    %v555 = vld [vmem:[%s7 + $0x8] sm:$0xff]
    %v556 = vld [vmem:[%s7 + $0x10] sm:$0xff]
    %v557 = vld [vmem:[%s7 + $0x18] sm:$0xff]
    %v558 = vld [vmem:[%s7 + $0x20] sm:$0xff]
    %v559 = vld [vmem:[%s7 + $0x28] sm:$0x7f]
    %v560 = vld [vmem:[%s8] sm:$0x1]
    %v561 = vld [vmem:[%s9] sm:$0xff]
    %v562 = vld [vmem:[%s9 + $0x8] sm:$0xff]
    %v563 = vld [vmem:[%s9 + $0x10] sm:$0xff]
    %v564 = vld [vmem:[%s9 + $0x18] sm:$0xff]
    %v565 = vld [vmem:[%s9 + $0x20] sm:$0xff]
    %v566 = vld [vmem:[%s9 + $0x28] sm:$0x7f]
    %v567 = vld [vmem:[%s10] sm:$0x1]
    %v569 = vlaneseq
    %v570 = vshrl.u32 %v569, 7
    %v571 = vsub.s32 0, %v570
    %v572 = vrot.slane %v560, %v571
    %v575 = vsel %vm74, %v521, 0
    %v578 = vsel %vm74, %v526, 0
    %v581 = vsel %vm74, %v531, 0
    %v584 = vsel %vm74, %v536, 0
    %v587 = vsel %vm74, %v541, 0
    %v590 = vsel %vm74, %v546, 0
    %v593 = vsel %vm74, %v551, 0
    %v596 = vsel %vm102, %v559, 0
    %598 = vmatprep.subr.mxu0 0.0
    %599 = vmatpush1.msra.mxu0 %v554
    %600 = vmatprep.subr.mxu0 0.0
    %601 = vmatpush1.msra.mxu0 %v555
    %602 = vmatprep.subr.mxu0 0.0
    %603 = vmatpush1.msra.mxu0 %v556
    %604 = vmatprep.subr.mxu0 0.0
    %605 = vmatpush1.msra.mxu0 %v557
    %606 = vmatprep.subr.mxu0 0.0
    %607 = vmatpush1.msra.mxu0 %v558
    %608 = vmatprep.subr.mxu0 0.0
    %609 = vmatpush1.msra.mxu0 %v596
    %610 = vmatprep.subr.mxu0 0.0
    %611 = vmatpush1.msra.mxu0 0.0
    %612 = vmatprep.subr.mxu0 0.0
    %613 = vmatpush1.msra.mxu0 0.0
    %614 = vmatprep.subr.mxu0 0.0
    %615 = vmatpush1.msra.mxu0 0.0
    %616 = vmatprep.subr.mxu0 0.0
    %617 = vmatpush1.msra.mxu0 0.0
    %618 = vmatprep.subr.mxu0 0.0
    %619 = vmatpush1.msra.mxu0 0.0
    %620 = vmatprep.subr.mxu0 0.0
    %621 = vmatpush1.msra.mxu0 0.0
    %622 = vmatprep.subr.mxu0 0.0
    %623 = vmatpush1.msra.mxu0 0.0
    %624 = vmatprep.subr.mxu0 0.0
    %625 = vmatpush1.msra.mxu0 0.0
    %626 = vmatprep.subr.mxu0 0.0
    %627 = vmatpush1.msra.mxu0 0.0
    %628 = vmatprep.subr.mxu0 0.0
    %629 = vmatpush1.msra.mxu0 0.0
    %630 = vmatprep.subr.mxu0 0.0
    %631 = vmatpush1.msra.mxu0 0.0
    %632 = vmatprep.subr.mxu0 0.0
    %633 = vmatpush1.msra.mxu0 0.0
    %634 = vmatprep.subr.mxu0 0.0
    %635 = vmatpush1.msra.mxu0 0.0
    %636 = vmatprep.subr.mxu0 0.0
    %637 = vmatpush1.msra.mxu0 0.0
    %638 = vmatprep.subr.mxu0 0.0
    %639 = vmatpush1.msra.mxu0 0.0
    %640 = vmatprep.subr.mxu0 0.0
    %641 = vmatpush1.msra.mxu0 0.0
    %642 = vmatprep.subr.mxu0 0.0
    %643 = vmatpush1.msra.mxu0 0.0
    %644 = vmatprep.subr.mxu0 0.0
    %645 = vmatpush1.msra.mxu0 0.0
    %646 = vmatprep.subr.mxu0 0.0
    %647 = vmatpush1.msra.mxu0 0.0
    %648 = vmatprep.subr.mxu0 0.0
    %649 = vmatpush1.msra.mxu0 0.0
    %650 = vmatprep.subr.mxu0 0.0
    %651 = vmatpush1.msra.mxu0 0.0
    %652 = vmatprep.subr.mxu0 0.0
    %653 = vmatpush1.msra.mxu0 0.0
    %654 = vmatprep.subr.mxu0 0.0
    %655 = vmatpush1.msra.mxu0 0.0
    %656 = vmatprep.subr.mxu0 0.0
    %657 = vmatpush1.msra.mxu0 0.0
    %658 = vmatprep.subr.mxu0 0.0
    %659 = vmatpush1.msra.mxu0 0.0
    %660 = vmatprep.subr.mxu0 0.0
    %661 = vmatpush1.msra.mxu0 0.0
    %662 = vmatprep.mubr.f32.mxu0 0.0
    %663 = vmatmul.mubr.f32.gmra.mrb[0].mxu0 %v575
    %v664 = vpop.f32.mrb[0].mxu0
    %v665 = vadd.f32 %v572, %v664
    %v666 = vpop.f32.mrb[0].mxu0
    %667 = vmatprep.mubr.f32.mxu0 0.0
    %668 = vmatmul.mubr.f32.gmra.mrb[0].mxu0 %v578
    %v669 = vpop.f32.mrb[0].mxu0
    %v670 = vadd.f32 %v572, %v669
    %v671 = vpop.f32.mrb[0].mxu0
    %672 = vmatprep.mubr.f32.mxu0 0.0
    %673 = vmatmul.mubr.f32.gmra.mrb[0].mxu0 %v581
    %v674 = vpop.f32.mrb[0].mxu0
    %v675 = vadd.f32 %v572, %v674
    %v676 = vpop.f32.mrb[0].mxu0
    %677 = vmatprep.mubr.f32.mxu0 0.0
    %678 = vmatmul.mubr.f32.gmra.mrb[0].mxu0 %v584
    %v679 = vpop.f32.mrb[0].mxu0
    %v680 = vadd.f32 %v572, %v679
    %v681 = vpop.f32.mrb[0].mxu0
    %682 = vmatprep.mubr.f32.mxu0 0.0
    %683 = vmatmul.mubr.f32.gmra.mrb[0].mxu0 %v587
    %v684 = vpop.f32.mrb[0].mxu0
    %v685 = vadd.f32 %v572, %v684
    %v686 = vpop.f32.mrb[0].mxu0
    %687 = vmatprep.mubr.f32.mxu0 0.0
    %688 = vmatmul.mubr.f32.gmra.mrb[0].mxu0 %v590
    %v689 = vpop.f32.mrb[0].mxu0
    %v690 = vadd.f32 %v572, %v689
    %v691 = vpop.f32.mrb[0].mxu0
    %692 = vmatprep.mubr.f32.mxu0 0.0
    %693 = vmatmul.mubr.f32.gmra.mrb[0].mxu0 %v593
    %v694 = vpop.f32.mrb[0].mxu0
    %v695 = vadd.f32 %v572, %v694
    %v696 = vpop.f32.mrb[0].mxu0
    %697 = vdwg.mxu0
    %vm698 = vcmp.gt.f32.partialorder %v665, 0.0
    %vm699 = vcmp.gt.f32.partialorder %v670, 0.0
    %vm700 = vcmp.gt.f32.partialorder %v675, 0.0
    %vm701 = vcmp.gt.f32.partialorder %v680, 0.0
    %vm702 = vcmp.gt.f32.partialorder %v685, 0.0
    %vm703 = vcmp.gt.f32.partialorder %v690, 0.0
    %vm704 = vcmp.gt.f32.partialorder %v695, 0.0
    %v705 = vmul.f32 %v665, 0.01
    %v706 = vmul.f32 %v670, 0.01
    %v707 = vmul.f32 %v675, 0.01
    %v708 = vmul.f32 %v680, 0.01
    %v709 = vmul.f32 %v685, 0.01
    %v710 = vmul.f32 %v690, 0.01
    %v711 = vmul.f32 %v695, 0.01
    %v712 = vsel %vm698, %v665, %v705
    %v713 = vsel %vm699, %v670, %v706
    %v714 = vsel %vm700, %v675, %v707
    %v715 = vsel %vm701, %v680, %v708
    %v716 = vsel %vm702, %v685, %v709
    %v717 = vsel %vm703, %v690, %v710
    %v718 = vsel %vm704, %v695, %v711
    %v720 = vlaneseq
    %v721 = vshrl.u32 %v720, 7
    %v722 = vsub.s32 0, %v721
    %v723 = vrot.slane %v567, %v722
    %v726 = vsel %vm74, %v712, 0
    %v729 = vsel %vm74, %v713, 0
    %v732 = vsel %vm74, %v714, 0
    %v735 = vsel %vm74, %v715, 0
    %v738 = vsel %vm74, %v716, 0
    %v741 = vsel %vm74, %v717, 0
    %v744 = vsel %vm74, %v718, 0
    %v747 = vsel %vm102, %v566, 0
    %749 = vmatprep.subr.mxu0 0.0
    %750 = vmatpush1.msra.mxu0 %v561
    %751 = vmatprep.subr.mxu0 0.0
    %752 = vmatpush1.msra.mxu0 %v562
    %753 = vmatprep.subr.mxu0 0.0
    %754 = vmatpush1.msra.mxu0 %v563
    %755 = vmatprep.subr.mxu0 0.0
    %756 = vmatpush1.msra.mxu0 %v564
    %757 = vmatprep.subr.mxu0 0.0
    %758 = vmatpush1.msra.mxu0 %v565
    %759 = vmatprep.subr.mxu0 0.0
    %760 = vmatpush1.msra.mxu0 %v747
    %761 = vmatprep.subr.mxu0 0.0
    %762 = vmatpush1.msra.mxu0 0.0
    %763 = vmatprep.subr.mxu0 0.0
    %764 = vmatpush1.msra.mxu0 0.0
    %765 = vmatprep.subr.mxu0 0.0
    %766 = vmatpush1.msra.mxu0 0.0
    %767 = vmatprep.subr.mxu0 0.0
    %768 = vmatpush1.msra.mxu0 0.0
    %769 = vmatprep.subr.mxu0 0.0
    %770 = vmatpush1.msra.mxu0 0.0
    %771 = vmatprep.subr.mxu0 0.0
    %772 = vmatpush1.msra.mxu0 0.0
    %773 = vmatprep.subr.mxu0 0.0
    %774 = vmatpush1.msra.mxu0 0.0
    %775 = vmatprep.subr.mxu0 0.0
    %776 = vmatpush1.msra.mxu0 0.0
    %777 = vmatprep.subr.mxu0 0.0
    %778 = vmatpush1.msra.mxu0 0.0
    %779 = vmatprep.subr.mxu0 0.0
    %780 = vmatpush1.msra.mxu0 0.0
    %781 = vmatprep.subr.mxu0 0.0
    %782 = vmatpush1.msra.mxu0 0.0
    %783 = vmatprep.subr.mxu0 0.0
    %784 = vmatpush1.msra.mxu0 0.0
    %785 = vmatprep.subr.mxu0 0.0
    %786 = vmatpush1.msra.mxu0 0.0
    %787 = vmatprep.subr.mxu0 0.0
    %788 = vmatpush1.msra.mxu0 0.0
    %789 = vmatprep.subr.mxu0 0.0
    %790 = vmatpush1.msra.mxu0 0.0
    %791 = vmatprep.subr.mxu0 0.0
    %792 = vmatpush1.msra.mxu0 0.0
    %793 = vmatprep.subr.mxu0 0.0
    %794 = vmatpush1.msra.mxu0 0.0
    %795 = vmatprep.subr.mxu0 0.0
    %796 = vmatpush1.msra.mxu0 0.0
    %797 = vmatprep.subr.mxu0 0.0
    %798 = vmatpush1.msra.mxu0 0.0
    %799 = vmatprep.subr.mxu0 0.0
    %800 = vmatpush1.msra.mxu0 0.0
    %801 = vmatprep.subr.mxu0 0.0
    %802 = vmatpush1.msra.mxu0 0.0
    %803 = vmatprep.subr.mxu0 0.0
    %804 = vmatpush1.msra.mxu0 0.0
    %805 = vmatprep.subr.mxu0 0.0
    %806 = vmatpush1.msra.mxu0 0.0
    %807 = vmatprep.subr.mxu0 0.0
    %808 = vmatpush1.msra.mxu0 0.0
    %809 = vmatprep.subr.mxu0 0.0
    %810 = vmatpush1.msra.mxu0 0.0
    %811 = vmatprep.subr.mxu0 0.0
    %812 = vmatpush1.msra.mxu0 0.0
    %813 = vmatprep.mubr.f32.mxu0 0.0
    %814 = vmatmul.mubr.f32.gmra.mrb[0].mxu0 %v726
    %v815 = vpop.f32.mrb[0].mxu0
    %v816 = vadd.f32 %v723, %v815
    %v817 = vpop.f32.mrb[0].mxu0
    %818 = vmatprep.mubr.f32.mxu0 0.0
    %819 = vmatmul.mubr.f32.gmra.mrb[0].mxu0 %v729
    %v820 = vpop.f32.mrb[0].mxu0
    %v821 = vadd.f32 %v723, %v820
    %v822 = vpop.f32.mrb[0].mxu0
    %823 = vmatprep.mubr.f32.mxu0 0.0
    %824 = vmatmul.mubr.f32.gmra.mrb[0].mxu0 %v732
    %v825 = vpop.f32.mrb[0].mxu0
    %v826 = vadd.f32 %v723, %v825
    %v827 = vpop.f32.mrb[0].mxu0
    %828 = vmatprep.mubr.f32.mxu0 0.0
    %829 = vmatmul.mubr.f32.gmra.mrb[0].mxu0 %v735
    %v830 = vpop.f32.mrb[0].mxu0
    %v831 = vadd.f32 %v723, %v830
    %v832 = vpop.f32.mrb[0].mxu0
    %833 = vmatprep.mubr.f32.mxu0 0.0
    %834 = vmatmul.mubr.f32.gmra.mrb[0].mxu0 %v738
    %v835 = vpop.f32.mrb[0].mxu0
    %v836 = vadd.f32 %v723, %v835
    %v837 = vpop.f32.mrb[0].mxu0
    %838 = vmatprep.mubr.f32.mxu0 0.0
    %839 = vmatmul.mubr.f32.gmra.mrb[0].mxu0 %v741
    %v840 = vpop.f32.mrb[0].mxu0
    %v841 = vadd.f32 %v723, %v840
    %v842 = vpop.f32.mrb[0].mxu0
    %843 = vmatprep.mubr.f32.mxu0 0.0
    %844 = vmatmul.mubr.f32.gmra.mrb[0].mxu0 %v744
    %v845 = vpop.f32.mrb[0].mxu0
    %v846 = vadd.f32 %v723, %v845
    %v847 = vpop.f32.mrb[0].mxu0
    %848 = vdwg.mxu0
    %v849 = vadd.f32 %v816, %v521
    %v850 = vadd.f32 %v821, %v526
    %v851 = vadd.f32 %v826, %v531
    %v852 = vadd.f32 %v831, %v536
    %v853 = vadd.f32 %v836, %v541
    %v854 = vadd.f32 %v841, %v546
    %v855 = vadd.f32 %v846, %v551
    %vm856 = vcmp.gt.f32.partialorder %v849, 0.0
    %vm857 = vcmp.gt.f32.partialorder %v850, 0.0
    %vm858 = vcmp.gt.f32.partialorder %v851, 0.0
    %vm859 = vcmp.gt.f32.partialorder %v852, 0.0
    %vm860 = vcmp.gt.f32.partialorder %v853, 0.0
    %vm861 = vcmp.gt.f32.partialorder %v854, 0.0
    %vm862 = vcmp.gt.f32.partialorder %v855, 0.0
    %v863 = vmul.f32 %v849, 0.01
    %v864 = vmul.f32 %v850, 0.01
    %v865 = vmul.f32 %v851, 0.01
    %v866 = vmul.f32 %v852, 0.01
    %v867 = vmul.f32 %v853, 0.01
    %v868 = vmul.f32 %v854, 0.01
    %v869 = vmul.f32 %v855, 0.01
    %v870 = vsel %vm856, %v849, %v863
    %v871 = vsel %vm857, %v850, %v864
    %v872 = vsel %vm858, %v851, %v865
    %v873 = vsel %vm859, %v852, %v866
    %v874 = vsel %vm860, %v853, %v867
    %v875 = vsel %vm861, %v854, %v868
    %v876 = vsel %vm862, %v855, %v869
    %v877 = vld [vmem:[%s2] sm:$0x3]
    %vm878 = vcmask 408576
    %v880 = vsel %vm878, %v877, 0
    %vm882 = vcmask 1041408
    %v884 = vsel %vm882, %v876, 0
    %886 = vmatprep.subr.mxu0 0.0
    %887 = vmatpush1.msra.mxu0 %v870
    %888 = vmatprep.subr.mxu0 0.0
    %889 = vmatpush1.msra.mxu0 %v871
    %890 = vmatprep.subr.mxu0 0.0
    %891 = vmatpush1.msra.mxu0 %v872
    %892 = vmatprep.subr.mxu0 0.0
    %893 = vmatpush1.msra.mxu0 %v873
    %894 = vmatprep.subr.mxu0 0.0
    %895 = vmatpush1.msra.mxu0 %v874
    %896 = vmatprep.subr.mxu0 0.0
    %897 = vmatpush1.msra.mxu0 %v875
    %898 = vmatprep.subr.mxu0 0.0
    %899 = vmatpush1.msra.mxu0 %v884
    %900 = vmatprep.subr.mxu0 0.0
    %901 = vmatpush1.msra.mxu0 0.0
    %902 = vmatprep.subr.mxu0 0.0
    %903 = vmatpush1.msra.mxu0 0.0
    %904 = vmatprep.subr.mxu0 0.0
    %905 = vmatpush1.msra.mxu0 0.0
    %906 = vmatprep.subr.mxu0 0.0
    %907 = vmatpush1.msra.mxu0 0.0
    %908 = vmatprep.subr.mxu0 0.0
    %909 = vmatpush1.msra.mxu0 0.0
    %910 = vmatprep.subr.mxu0 0.0
    %911 = vmatpush1.msra.mxu0 0.0
    %912 = vmatprep.subr.mxu0 0.0
    %913 = vmatpush1.msra.mxu0 0.0
    %914 = vmatprep.subr.mxu0 0.0
    %915 = vmatpush1.msra.mxu0 0.0
    %916 = vmatprep.subr.mxu0 0.0
    %917 = vmatpush1.msra.mxu0 0.0
    %918 = vmatprep.subr.mxu0 0.0
    %919 = vmatpush1.msra.mxu0 0.0
    %920 = vmatprep.subr.mxu0 0.0
    %921 = vmatpush1.msra.mxu0 0.0
    %922 = vmatprep.subr.mxu0 0.0
    %923 = vmatpush1.msra.mxu0 0.0
    %924 = vmatprep.subr.mxu0 0.0
    %925 = vmatpush1.msra.mxu0 0.0
    %926 = vmatprep.subr.mxu0 0.0
    %927 = vmatpush1.msra.mxu0 0.0
    %928 = vmatprep.subr.mxu0 0.0
    %929 = vmatpush1.msra.mxu0 0.0
    %930 = vmatprep.subr.mxu0 0.0
    %931 = vmatpush1.msra.mxu0 0.0
    %932 = vmatprep.subr.mxu0 0.0
    %933 = vmatpush1.msra.mxu0 0.0
    %934 = vmatprep.subr.mxu0 0.0
    %935 = vmatpush1.msra.mxu0 0.0
    %936 = vmatprep.subr.mxu0 0.0
    %937 = vmatpush1.msra.mxu0 0.0
    %938 = vmatprep.subr.mxu0 0.0
    %939 = vmatpush1.msra.mxu0 0.0
    %940 = vmatprep.subr.mxu0 0.0
    %941 = vmatpush1.msra.mxu0 0.0
    %942 = vmatprep.subr.mxu0 0.0
    %943 = vmatpush1.msra.mxu0 0.0
    %944 = vmatprep.subr.mxu0 0.0
    %945 = vmatpush1.msra.mxu0 0.0
    %946 = vmatprep.subr.mxu0 0.0
    %947 = vmatpush1.msra.mxu0 0.0
    %948 = vmatprep.subr.mxu0 0.0
    %949 = vmatpush1.msra.mxu0 0.0
    %950 = vmatprep.mubr.f32.mxu0 0.0
    %951 = vmatmul.mubr.f32.gmra.mrb[0].mxu0 %v880
    %v952 = vpop.f32.mrb[0].mxu0
    %v953 = vadd.f32 0.0, %v952
    %v954 = vpop.f32.mrb[0].mxu0
    %955 = vdwg.mxu0
    %v956 = vld [vmem:[%s11] sm:$0xff]
    %v957 = vld [vmem:[%s11 + $0x8] sm:$0xff]
    %v958 = vld [vmem:[%s11 + $0x10] sm:$0xff]
    %v959 = vld [vmem:[%s11 + $0x18] sm:$0xff]
    %v960 = vld [vmem:[%s11 + $0x20] sm:$0xff]
    %v961 = vld [vmem:[%s11 + $0x28] sm:$0x7f]
    %v962 = vld [vmem:[%s12] sm:$0x1]
    %v964 = vlaneseq
    %v965 = vshrl.u32 %v964, 7
    %v966 = vsub.s32 0, %v965
    %v967 = vrot.slane %v962, %v966
    %v970 = vsel %vm74, %v953, 0
    %v973 = vsel %vm102, %v961, 0
    %975 = vmatprep.subr.mxu0 0.0
    %976 = vmatpush1.msra.mxu0 %v956
    %977 = vmatprep.subr.mxu0 0.0
    %978 = vmatpush1.msra.mxu0 %v957
    %979 = vmatprep.subr.mxu0 0.0
    %980 = vmatpush1.msra.mxu0 %v958
    %981 = vmatprep.subr.mxu0 0.0
    %982 = vmatpush1.msra.mxu0 %v959
    %983 = vmatprep.subr.mxu0 0.0
    %984 = vmatpush1.msra.mxu0 %v960
    %985 = vmatprep.subr.mxu0 0.0
    %986 = vmatpush1.msra.mxu0 %v973
    %987 = vmatprep.subr.mxu0 0.0
    %988 = vmatpush1.msra.mxu0 0.0
    %989 = vmatprep.subr.mxu0 0.0
    %990 = vmatpush1.msra.mxu0 0.0
    %991 = vmatprep.subr.mxu0 0.0
    %992 = vmatpush1.msra.mxu0 0.0
    %993 = vmatprep.subr.mxu0 0.0
    %994 = vmatpush1.msra.mxu0 0.0
    %995 = vmatprep.subr.mxu0 0.0
    %996 = vmatpush1.msra.mxu0 0.0
    %997 = vmatprep.subr.mxu0 0.0
    %998 = vmatpush1.msra.mxu0 0.0
    %999 = vmatprep.subr.mxu0 0.0
    %1000 = vmatpush1.msra.mxu0 0.0
    %1001 = vmatprep.subr.mxu0 0.0
    %1002 = vmatpush1.msra.mxu0 0.0
    %1003 = vmatprep.subr.mxu0 0.0
    %1004 = vmatpush1.msra.mxu0 0.0
    %1005 = vmatprep.subr.mxu0 0.0
    %1006 = vmatpush1.msra.mxu0 0.0
    %1007 = vmatprep.subr.mxu0 0.0
    %1008 = vmatpush1.msra.mxu0 0.0
    %1009 = vmatprep.subr.mxu0 0.0
    %1010 = vmatpush1.msra.mxu0 0.0
    %1011 = vmatprep.subr.mxu0 0.0
    %1012 = vmatpush1.msra.mxu0 0.0
    %1013 = vmatprep.subr.mxu0 0.0
    %1014 = vmatpush1.msra.mxu0 0.0
    %1015 = vmatprep.subr.mxu0 0.0
    %1016 = vmatpush1.msra.mxu0 0.0
    %1017 = vmatprep.subr.mxu0 0.0
    %1018 = vmatpush1.msra.mxu0 0.0
    %1019 = vmatprep.subr.mxu0 0.0
    %1020 = vmatpush1.msra.mxu0 0.0
    %1021 = vmatprep.subr.mxu0 0.0
    %1022 = vmatpush1.msra.mxu0 0.0
    %1023 = vmatprep.subr.mxu0 0.0
    %1024 = vmatpush1.msra.mxu0 0.0
    %1025 = vmatprep.subr.mxu0 0.0
    %1026 = vmatpush1.msra.mxu0 0.0
    %1027 = vmatprep.subr.mxu0 0.0
    %1028 = vmatpush1.msra.mxu0 0.0
    %1029 = vmatprep.subr.mxu0 0.0
    %1030 = vmatpush1.msra.mxu0 0.0
    %1031 = vmatprep.subr.mxu0 0.0
    %1032 = vmatpush1.msra.mxu0 0.0
    %1033 = vmatprep.subr.mxu0 0.0
    %1034 = vmatpush1.msra.mxu0 0.0
    %1035 = vmatprep.subr.mxu0 0.0
    %1036 = vmatpush1.msra.mxu0 0.0
    %1037 = vmatprep.subr.mxu0 0.0
    %1038 = vmatpush1.msra.mxu0 0.0
    %1039 = vmatprep.mubr.f32.mxu0 0.0
    %1040 = vmatmul.mubr.f32.gmra.mrb[0].mxu0 %v970
    %v1041 = vpop.f32.mrb[0].mxu0
    %v1042 = vadd.f32 %v967, %v1041
    %v1043 = vpop.f32.mrb[0].mxu0
    %1044 = vdwg.mxu0
    %vm1045 = vcmask 17408
    %1046 = vst.msk [vmem:[#allocation2] sm:$0x3] %vm1045, %v1042
    // Predicated region
    $region54: #{task_block_forward.1} parent=1 // pred_check
      _
    $region55: #{task_block_forward.1} parent=1 // pred_check_branch
      %1048 = sbr.rel (0) target = $region57
    $region56: #{task_block_forward.1} parent=1 // pred_region
      %s1050 = ssub.s32 32, 32
      %1051 = vsyncadd [#allocation3], %s1050
      %s1053 = sshll.u32 [#allocation2], 4
      %s1054 = int_to_ptr.vmem [resolvable:$true] %s1053
      %1056 = dma.vmem_to_hbm [thread:$0]  %s1054, 32, %s13, [#allocation3]
    $region57: #{task_block_forward.1} parent=1 // pred_fallthru
      _
    // Predicated region
    $region58: #{task_block_forward.1} parent=1 // pred_check
      _
    $region59: #{task_block_forward.1} parent=1 // pred_check_branch
      %1058 = sbr.rel (0) target = $region61
    $region60: #{task_block_forward.1} parent=1 // pred_region
      %1059 = dma.done [#allocation3], 32
    $region61: #{task_block_forward.1} parent=1 // pred_fallthru
      _
    %1060 = vsyncpa [#allocation3], 1

</llo_original>
